<compile_context>
chip_gen: v7x
topology: tpu7x:2x2x1
jax: 0.10.0
libtpu: 0.0.40
codegen_flags: <defaults>
</compile_context>

<pallas_src>
import jax
import jax.numpy as jnp
from jax.experimental import pallas as pl
from jax.experimental.pallas import tpu as pltpu


def _round_up(x, m):
    return ((x + m - 1) // m) * m


def _decoder_kernel(x_ref, w_ref, b_ref, o_ref):
    # x_ref: (TILE_B, A*P), w_ref: (A*P, A), b_ref: (1, A), o_ref: (TILE_B, A)
    acc = jnp.dot(x_ref[...], w_ref[...], preferred_element_type=jnp.float32)
    acc = acc + b_ref[...].astype(jnp.float32)
    o_ref[...] = acc.astype(o_ref.dtype)


def pop_spike_decoder(pop_act, weight, bias, act_dim, pop_dim):
    """pop_act: (B, act_dim*pop_dim) or (B, act_dim, pop_dim); returns (B, act_dim)."""
    ap = act_dim * pop_dim
    x = pop_act.reshape(-1, ap)
    B = x.shape[0]

    # Block-diagonal weight: W_blk[a*P + p, a] = weight[a, p].
    w_blk = (weight[:, :, None].astype(jnp.float32)
             * jnp.eye(act_dim, dtype=jnp.float32)[:, None, :]).reshape(ap, act_dim)
    w_blk = w_blk.astype(x.dtype)
    b2d = bias.reshape(1, act_dim)

    # Tile over batch: biggest-tile-that-fits, multiple of 8, capped at 1024 rows
    # (1024 * AP * 4B * 2 buffers stays well under the 32 MiB scoped VMEM default
    # for any reasonable act_dim*pop_dim, including v7x's 64 MiB physical VMEM).
    tile_b = min(1024, _round_up(B, 8))
    b_pad = _round_up(B, tile_b)
    if b_pad != B:
        x = jnp.pad(x, ((0, b_pad - B), (0, 0)))
    grid = (b_pad // tile_b,)

    out = pl.pallas_call(
        _decoder_kernel,
        out_shape=jax.ShapeDtypeStruct((b_pad, act_dim), pop_act.dtype),
        grid=grid,
        in_specs=[
            pl.BlockSpec((tile_b, ap), lambda i: (i, 0)),      # x: tiled over batch
            pl.BlockSpec((ap, act_dim), lambda i: (0, 0)),     # W_blk: resident
            pl.BlockSpec((1, act_dim), lambda i: (0, 0)),      # bias: resident
        ],
        out_specs=pl.BlockSpec((tile_b, act_dim), lambda i: (i, 0)),
        compiler_params=pltpu.CompilerParams(
            dimension_semantics=("parallel",),
        ),
    )(x, w_blk, b2d)

    return out[:B]


def init_params(key, act_dim, pop_dim, dtype=jnp.float32):
    """Deterministic init mirroring nn.Conv1d default (uniform +/- 1/sqrt(fan_in))."""
    kw, kb = jax.random.split(key)
    fan_in = pop_dim  # in_channels/groups * kernel_size = 1 * pop_dim
    bound = 1.0 / (fan_in ** 0.5)
    # Conv1d weight shape (act_dim, 1, pop_dim) -> squeeze the singleton group dim.
    weight = jax.random.uniform(kw, (act_dim, pop_dim), dtype, -bound, bound)
    bias = jax.random.uniform(kb, (act_dim,), dtype, -bound, bound)
    return weight, bias


if __name__ == "__main__":
    act_dim, pop_dim, batch = 4, 16, 2

    key = jax.random.PRNGKey(0)
    k_x, k_p = jax.random.split(key)
    weight, bias = init_params(k_p, act_dim, pop_dim)
    pop_act = jax.random.uniform(k_x, (batch, act_dim * pop_dim), jnp.float32)

    raw_act = pop_spike_decoder(pop_act, weight, bias, act_dim, pop_dim)
    raw_act = jax.block_until_ready(raw_act)

    # Reference check (plain JAX) for the grouped conv semantics.
    x3 = pop_act.reshape(batch, act_dim, pop_dim)
    ref = jnp.sum(x3 * weight[None], axis=-1) + bias[None]
    assert raw_act.shape == (batch, act_dim)
    assert jnp.allclose(raw_act, ref, atol=1e-5, rtol=1e-5)

    # TODO(synk): output_activation (nn.Tanh) is stored by the module but never
    # applied in forward, so it is intentionally not implemented here.

    print("KERNEL_OK")
</pallas_src>

<mosaic_0001>
module attributes {stable_mosaic.version = 11 : i64} {
  func.func @_decoder_kernel(%arg0: i32, %arg1: memref<8x64xf32, #tpu.memory_space<vmem>>, %arg2: memref<64x4xf32, #tpu.memory_space<vmem>>, %arg3: memref<1x4xf32, #tpu.memory_space<vmem>>, %arg4: memref<8x4xf32, #tpu.memory_space<vmem>>) attributes {dimension_semantics = [#tpu.dimension_semantics<parallel>], iteration_bounds = array<i64: 1>, scalar_prefetch = 0 : i64, scratch_operands = 0 : i64, tpu.core_type = #tpu.core_type<tc>, window_params = [{transform_indices = @transform_0, window_bounds = array<i64: 8, 64>}, {pipeline_mode = #tpu.pipeline_mode<synchronous>, transform_indices = @transform_1, window_bounds = array<i64: 64, 4>}, {pipeline_mode = #tpu.pipeline_mode<synchronous>, transform_indices = @transform_2, window_bounds = array<i64: 1, 4>}, {transform_indices = @transform_3, window_bounds = array<i64: 8, 4>}]} {
    %c0 = arith.constant 0 : index
    %c0_0 = arith.constant 0 : index
    %0 = vector.load %arg1[%c0, %c0_0] : memref<8x64xf32, #tpu.memory_space<vmem>>, vector<8x64xf32>
    %c0_1 = arith.constant 0 : index
    %c0_2 = arith.constant 0 : index
    %1 = vector.load %arg2[%c0_1, %c0_2] : memref<64x4xf32, #tpu.memory_space<vmem>>, vector<64x4xf32>
    %cst = arith.constant dense<0.000000e+00> : vector<8x4xf32>
    %2 = tpu.matmul %0, %1, %cst {dimension_numbers = #tpu.dot_dimension_numbers<[1], [0], [0], [1], [0, 0, 1, 1], [], []>} : vector<8x64xf32>, vector<64x4xf32>, vector<8x4xf32> -> vector<8x4xf32>
    %c0_3 = arith.constant 0 : index
    %c0_4 = arith.constant 0 : index
    %3 = vector.load %arg3[%c0_3, %c0_4] : memref<1x4xf32, #tpu.memory_space<vmem>>, vector<1x4xf32>
    %4 = vector.broadcast %3 : vector<1x4xf32> to vector<8x4xf32>
    %5 = arith.addf %2, %4 : vector<8x4xf32>
    %c0_5 = arith.constant 0 : index
    %c0_6 = arith.constant 0 : index
    %6 = vector.load %arg4[%c0_5, %c0_6] : memref<8x4xf32, #tpu.memory_space<vmem>>, vector<8x4xf32>
    tpu.vector_store %arg4[%c0_5, %c0_6], %5 {strides = array<i32>} : memref<8x4xf32, #tpu.memory_space<vmem>>, vector<8x4xf32>,
    return
  }
  func.func @transform_0(%arg0: i32) -> (i32, i32) {
    %c0_i32 = arith.constant 0 : i32
    %c0_i32_0 = arith.constant 0 : i32
    return %arg0, %c0_i32 : i32, i32
  }
  func.func @transform_1(%arg0: i32) -> (i32, i32) {
    %c0_i32 = arith.constant 0 : i32
    %c0_i32_0 = arith.constant 0 : i32
    %c0_i32_1 = arith.constant 0 : i32
    return %c0_i32, %c0_i32_0 : i32, i32
  }
  func.func @transform_2(%arg0: i32) -> (i32, i32) {
    %c0_i32 = arith.constant 0 : i32
    %c0_i32_0 = arith.constant 0 : i32
    %c0_i32_1 = arith.constant 0 : i32
    return %c0_i32, %c0_i32_0 : i32, i32
  }
  func.func @transform_3(%arg0: i32) -> (i32, i32) {
    %c0_i32 = arith.constant 0 : i32
    %c0_i32_0 = arith.constant 0 : i32
    return %arg0, %c0_i32 : i32, i32
  }
}

</mosaic_0001>

<llo_original>
// kernel: tpu_custom_call.1
$region0: #{tpu_custom_call.1}
  #allocation0 [shape = 'u32[]', space=smem, size = 0x4, offset = 0x4, fixed_abs, tag = 'smem constant byte address 0x4 - core index']
  #allocation1 [shape = 'u32[144,128]{1,0:T(1,128)}', space=vmem, size = 0x12000, scoped, tag = 'internal scratch']
  %s0 = inlined_call_operand.vmem [shape: f32[8,64], index: 0, kind: input, shape index: {}]
  %s1 = inlined_call_operand.vmem [shape: f32[64,4], index: 1, kind: input, shape index: {}]
  %s2 = inlined_call_operand.vmem [shape: f32[1,4], index: 2, kind: input, shape index: {}]
  %s3 = inlined_call_operand.vmem [shape: f32[8,4], index: 3, kind: output, shape index: {}]
  %s4 = sld [smem:[#allocation0]]
  $region22: #{tpu_custom_call.1} parent=0
    _
  %s6 = ssub.s32 1, %s4
  %s7 = scalar_select 0, %s6, %s4
  // Predicated region
  $region2: #{tpu_custom_call.1} parent=0 // pred_check
    _
  $region3: #{tpu_custom_call.1} parent=0 // pred_check_branch
    %9 = sbr.rel (0) target = $region5
  $region4: #{tpu_custom_call.1} parent=0 // pred_region
    _
  $region5: #{tpu_custom_call.1} parent=0 // pred_fallthru
    _
  // Predicated region
  $region6: #{tpu_custom_call.1} parent=0 // pred_check
    _
  $region7: #{tpu_custom_call.1} parent=0 // pred_check_branch
    %11 = sbr.rel (0) target = $region9
  $region8: #{tpu_custom_call.1} parent=0 // pred_region
    _
  $region9: #{tpu_custom_call.1} parent=0 // pred_fallthru
    _
  // Predicated region
  $region10: #{tpu_custom_call.1} parent=0 // pred_check
    _
  $region11: #{tpu_custom_call.1} parent=0 // pred_check_branch
    %13 = sbr.rel (0) target = $region13
  $region12: #{tpu_custom_call.1} parent=0 // pred_region
    _
  $region13: #{tpu_custom_call.1} parent=0 // pred_fallthru
    _
  %v14 = vld [vmem:[%s0] sm:$0xff]
  %v15 = vld [vmem:[%s1] sm:$0xff]
  %v16 = vld [vmem:[%s1 + $0x8] sm:$0xff]
  %v17 = vld [vmem:[%s1 + $0x10] sm:$0xff]
  %v18 = vld [vmem:[%s1 + $0x18] sm:$0xff]
  %v19 = vld [vmem:[%s1 + $0x20] sm:$0xff]
  %v20 = vld [vmem:[%s1 + $0x28] sm:$0xff]
  %v21 = vld [vmem:[%s1 + $0x30] sm:$0xff]
  %v22 = vld [vmem:[%s1 + $0x38] sm:$0xff]
  %v23 = vld [vmem:[%s2] sm:$0x1]
  %v25 = vlaneseq
  %v26 = vshrl.u32 %v25, 7
  %v27 = vsub.s32 0, %v26
  %v28 = vrot.slane %v23, %v27
  %vm30 = vcmask 523264
  %v32 = vsel %vm30, %v14, 0
  %34 = vmatprep.subr.mxu0 0.0
  %35 = vmatpush1.msra.mxu0 %v15
  %36 = vmatprep.subr.mxu0 0.0
  %37 = vmatpush1.msra.mxu0 %v16
  %38 = vmatprep.subr.mxu0 0.0
  %39 = vmatpush1.msra.mxu0 %v17
  %40 = vmatprep.subr.mxu0 0.0
  %41 = vmatpush1.msra.mxu0 %v18
  %42 = vmatprep.subr.mxu0 0.0
  %43 = vmatpush1.msra.mxu0 %v19
  %44 = vmatprep.subr.mxu0 0.0
  %45 = vmatpush1.msra.mxu0 %v20
  %46 = vmatprep.subr.mxu0 0.0
  %47 = vmatpush1.msra.mxu0 %v21
  %48 = vmatprep.subr.mxu0 0.0
  %49 = vmatpush1.msra.mxu0 %v22
  %50 = vmatprep.subr.mxu0 0.0
  %51 = vmatpush1.msra.mxu0 0.0
  %52 = vmatprep.subr.mxu0 0.0
  %53 = vmatpush1.msra.mxu0 0.0
  %54 = vmatprep.subr.mxu0 0.0
  %55 = vmatpush1.msra.mxu0 0.0
  %56 = vmatprep.subr.mxu0 0.0
  %57 = vmatpush1.msra.mxu0 0.0
  %58 = vmatprep.subr.mxu0 0.0
  %59 = vmatpush1.msra.mxu0 0.0
  %60 = vmatprep.subr.mxu0 0.0
  %61 = vmatpush1.msra.mxu0 0.0
  %62 = vmatprep.subr.mxu0 0.0
  %63 = vmatpush1.msra.mxu0 0.0
  %64 = vmatprep.subr.mxu0 0.0
  %65 = vmatpush1.msra.mxu0 0.0
  %66 = vmatprep.subr.mxu0 0.0
  %67 = vmatpush1.msra.mxu0 0.0
  %68 = vmatprep.subr.mxu0 0.0
  %69 = vmatpush1.msra.mxu0 0.0
  %70 = vmatprep.subr.mxu0 0.0
  %71 = vmatpush1.msra.mxu0 0.0
  %72 = vmatprep.subr.mxu0 0.0
  %73 = vmatpush1.msra.mxu0 0.0
  %74 = vmatprep.subr.mxu0 0.0
  %75 = vmatpush1.msra.mxu0 0.0
  %76 = vmatprep.subr.mxu0 0.0
  %77 = vmatpush1.msra.mxu0 0.0
  %78 = vmatprep.subr.mxu0 0.0
  %79 = vmatpush1.msra.mxu0 0.0
  %80 = vmatprep.subr.mxu0 0.0
  %81 = vmatpush1.msra.mxu0 0.0
  %82 = vmatprep.subr.mxu0 0.0
  %83 = vmatpush1.msra.mxu0 0.0
  %84 = vmatprep.subr.mxu0 0.0
  %85 = vmatpush1.msra.mxu0 0.0
  %86 = vmatprep.subr.mxu0 0.0
  %87 = vmatpush1.msra.mxu0 0.0
  %88 = vmatprep.subr.mxu0 0.0
  %89 = vmatpush1.msra.mxu0 0.0
  %90 = vmatprep.subr.mxu0 0.0
  %91 = vmatpush1.msra.mxu0 0.0
  %92 = vmatprep.subr.mxu0 0.0
  %93 = vmatpush1.msra.mxu0 0.0
  %94 = vmatprep.subr.mxu0 0.0
  %95 = vmatpush1.msra.mxu0 0.0
  %96 = vmatprep.subr.mxu0 0.0
  %97 = vmatpush1.msra.mxu0 0.0
  %98 = vmatprep.mubr.f32.mxu0 0.0
  %99 = vmatmul.mubr.f32.gmra.mrb[0].mxu0 %v32
  %v100 = vpop.f32.mrb[0].mxu0
  %v101 = vadd.f32 %v28, %v100
  %v102 = vpop.f32.mrb[0].mxu0
  %103 = vdwg.mxu0
  %vm104 = vcmask 31744
  %105 = vst.msk [vmem:[%s3] sm:$0xff] %vm104, %v101
  // Predicated region
  $region14: #{tpu_custom_call.1} parent=0 // pred_check
    _
  $region15: #{tpu_custom_call.1} parent=0 // pred_check_branch
    %107 = sbr.rel (0) target = $region17
  $region16: #{tpu_custom_call.1} parent=0 // pred_region
    _
  $region17: #{tpu_custom_call.1} parent=0 // pred_fallthru
    _
  // Predicated region
  $region18: #{tpu_custom_call.1} parent=0 // pred_check
    _
  $region19: #{tpu_custom_call.1} parent=0 // pred_check_branch
    %109 = sbr.rel (0) target = $region21
  $region20: #{tpu_custom_call.1} parent=0 // pred_region
    _
  $region21: #{tpu_custom_call.1} parent=0 // pred_fallthru
    _

</llo_original>
